<compile_context>
chip_gen: v5e
topology: v5e:2x2
jax: 0.10.0
libtpu: 0.0.40
codegen_flags: <defaults>
</compile_context>

<pallas_src>
import functools

import jax
import jax.numpy as jnp
from jax import lax
from jax.experimental import pallas as pl
from jax.experimental.pallas import tpu as pltpu


def _cosface_kernel(emb_ref, ker_ref, inv_row_ref, inv_col_ref, lab_ref,
                    out_ref, *, s, m, tile_c):
    # emb_ref    : (tile_b, D)      dot dtype (bf16 or f32)
    # ker_ref    : (D, tile_c)      dot dtype
    # inv_row_ref: (tile_b, 1)      f32   1 / ||emb_row||
    # inv_col_ref: (1, tile_c)      f32   1 / ||W_col||
    # lab_ref    : (tile_b, 1)      int32 (-1 => no margin for this row)
    # out_ref    : (tile_b, tile_c) f32

    # MXU matmul on raw operands; normalization folded into the f32 epilogue.
    cos = jnp.dot(emb_ref[...], ker_ref[...],
                  preferred_element_type=jnp.float32)
    cos = cos * inv_row_ref[...]          # scale by 1/||emb|| (per row)
    cos = cos * inv_col_ref[...]          # scale by 1/||W||   (per column)
    cos = jnp.clip(cos, -1.0, 1.0)

    # Margin scatter: subtract m at column == label for rows with label != -1.
    j = pl.program_id(1)                  # class-tile index
    col = lax.broadcasted_iota(jnp.int32, cos.shape, 1) + j * tile_c
    lab = lab_ref[...]                    # (tile_b, 1)
    hit = jnp.logical_and(col == lab, lab != -1)
    cos = cos - jnp.where(hit, jnp.float32(m), jnp.float32(0.0))

    out_ref[...] = cos * jnp.float32(s)


def _pick_tile(total, preferred, quantum):
    """Largest multiple of `quantum` <= `preferred` dividing `total`,
    else `total` itself (full extent, always legal)."""
    if total <= preferred:
        return total
    t = (preferred // quantum) * quantum
    while t >= quantum:
        if total % t == 0:
            return t
        t -= quantum
    return total


def cosface_forward(embeddings, kernel, label, *, s=64.0, m=0.35,
                    tile_b=None, tile_c=None, dot_dtype=jnp.bfloat16):
    """embeddings: (B, D) f32, kernel: (D, C) f32, label: (B,) int32."""
    B, D = embeddings.shape
    D2, C = kernel.shape
    assert D2 == D

    # Reciprocal L2 norms precomputed once: O(B*D + D*C) vs O(B*D*C) matmul.
    # Computed in f32 from the original weights so bf16 casting below does not
    # perturb the normalization.
    emb_f32 = embeddings.astype(jnp.float32)
    ker_f32 = kernel.astype(jnp.float32)
    inv_row = lax.rsqrt(jnp.sum(emb_f32 * emb_f32, axis=1, keepdims=True))  # (B, 1)
    inv_col = lax.rsqrt(jnp.sum(ker_f32 * ker_f32, axis=0, keepdims=True))  # (1, C)
    lab2d = label.astype(jnp.int32).reshape(B, 1)

    emb = embeddings.astype(dot_dtype)
    ker = kernel.astype(dot_dtype)   # bf16 halves the streamed weight bytes

    if tile_b is None:
        tile_b = _pick_tile(B, 256, 8)      # give the MXU a real M when B allows
    if tile_c is None:
        tile_c = _pick_tile(C, 512, 128)    # lane-dense output, HBM-roofline tile
    assert B % tile_b == 0 and C % tile_c == 0

    kern = functools.partial(_cosface_kernel, s=s, m=m, tile_c=tile_c)
    return pl.pallas_call(
        kern,
        out_shape=jax.ShapeDtypeStruct((B, C), jnp.float32),
        grid_spec=pltpu.PrefetchScalarGridSpec(
            num_scalar_prefetch=0,
            grid=(B // tile_b, C // tile_c),
            in_specs=[
                pl.BlockSpec((tile_b, D), lambda i, j: (i, 0)),   # embeddings tile
                pl.BlockSpec((D, tile_c), lambda i, j: (0, j)),   # weight column tile
                pl.BlockSpec((tile_b, 1), lambda i, j: (i, 0)),   # 1/row-norm
                pl.BlockSpec((1, tile_c), lambda i, j: (0, j)),   # 1/col-norm
                pl.BlockSpec((tile_b, 1), lambda i, j: (i, 0)),   # labels
            ],
            out_specs=pl.BlockSpec((tile_b, tile_c), lambda i, j: (i, j)),
        ),
        compiler_params=pltpu.CompilerParams(
            dimension_semantics=("parallel", "parallel"),
            # Explicit budget: above the 32 MiB scoped default, with headroom
            # under v7x's 64 MiB physical VMEM (v5e/v6e have 128 MiB).
            vmem_limit_bytes=48 * 1024 * 1024,
        ),
    )(emb, ker, inv_row, inv_col, lab2d)


def cosface_reference(embeddings, kernel, label, *, s=64.0, m=0.35):
    emb_n = embeddings / jnp.linalg.norm(embeddings, axis=1, keepdims=True)
    ker_n = kernel / jnp.linalg.norm(kernel, axis=0, keepdims=True)
    cos = jnp.clip(emb_n @ ker_n, -1.0, 1.0)
    B, C = cos.shape
    col = jnp.arange(C)[None, :]
    hit = (col == label[:, None]) & (label[:, None] != -1)
    return (cos - jnp.where(hit, m, 0.0)) * s


if __name__ == "__main__":
    key = jax.random.PRNGKey(0)
    k_emb, k_ker, k_lab = jax.random.split(key, 3)

    B = 8               # batch
    in_features = 32
    out_features = 256  # classes

    embeddings = jax.random.normal(k_emb, (B, in_features), dtype=jnp.float32)
    # nn.init.normal_(self.kernel, std=0.01)
    kernel = 0.01 * jax.random.normal(k_ker, (in_features, out_features),
                                      dtype=jnp.float32)
    label = jax.random.randint(k_lab, (B,), 0, out_features, dtype=jnp.int32)
    # mark a couple of rows as "ignore" (label == -1), as the module handles
    label = label.at[1].set(-1).at[5].set(-1)

    ref = cosface_reference(embeddings, kernel, label, s=64.0, m=0.35)

    # 1) Exact-semantics check with f32 dot operands.
    out_f32 = jax.block_until_ready(
        cosface_forward(embeddings, kernel, label, s=64.0, m=0.35,
                        dot_dtype=jnp.float32))
    assert out_f32.shape == (B, out_features)
    assert jnp.allclose(out_f32, ref, atol=1e-4, rtol=1e-4), "f32 mismatch"

    # 2) Fast path: bf16 dot operands (halves weight HBM traffic). cos is in
    #    [-1, 1] and scaled by s=64, so bf16 operand rounding bounds the
    #    absolute output error well under 0.6.
    out_bf16 = jax.block_until_ready(
        cosface_forward(embeddings, kernel, label, s=64.0, m=0.35,
                        dot_dtype=jnp.bfloat16))
    assert out_bf16.shape == (B, out_features)
    assert jnp.allclose(out_bf16, ref, atol=0.6, rtol=0.0), "bf16 mismatch"

    print("KERNEL_OK")
</pallas_src>

<mosaic_0001>
module attributes {stable_mosaic.version = 11 : i64} {
  func.func @_cosface_kernel(%arg0: i32, %arg1: i32, %arg2: memref<8x32xf32, #tpu.memory_space<vmem>>, %arg3: memref<32x256xf32, #tpu.memory_space<vmem>>, %arg4: memref<8x1xf32, #tpu.memory_space<vmem>>, %arg5: memref<1x256xf32, #tpu.memory_space<vmem>>, %arg6: memref<8x1xi32, #tpu.memory_space<vmem>>, %arg7: memref<8x256xf32, #tpu.memory_space<vmem>>) attributes {dimension_semantics = [#tpu.dimension_semantics<parallel>, #tpu.dimension_semantics<parallel>], iteration_bounds = array<i64: 1, 1>, scalar_prefetch = 0 : i64, scratch_operands = 0 : i64, tpu.core_type = #tpu.core_type<tc>, window_params = [{transform_indices = @transform_0, window_bounds = array<i64: 8, 32>}, {transform_indices = @transform_1, window_bounds = array<i64: 32, 256>}, {transform_indices = @transform_2, window_bounds = array<i64: 8, 1>}, {transform_indices = @transform_3, window_bounds = array<i64: 1, 256>}, {transform_indices = @transform_4, window_bounds = array<i64: 8, 1>}, {transform_indices = @transform_5, window_bounds = array<i64: 8, 256>}]} {
    %c0 = arith.constant 0 : index
    %c0_0 = arith.constant 0 : index
    %0 = vector.load %arg2[%c0, %c0_0] : memref<8x32xf32, #tpu.memory_space<vmem>>, vector<8x32xf32>
    %c0_1 = arith.constant 0 : index
    %c0_2 = arith.constant 0 : index
    %1 = vector.load %arg3[%c0_1, %c0_2] : memref<32x256xf32, #tpu.memory_space<vmem>>, vector<32x256xf32>
    %cst = arith.constant dense<0.000000e+00> : vector<8x256xf32>
    %2 = tpu.matmul %0, %1, %cst {dimension_numbers = #tpu.dot_dimension_numbers<[1], [0], [0], [1], [0, 0, 1, 1], [], []>} : vector<8x32xf32>, vector<32x256xf32>, vector<8x256xf32> -> vector<8x256xf32>
    %c0_3 = arith.constant 0 : index
    %c0_4 = arith.constant 0 : index
    %3 = vector.load %arg4[%c0_3, %c0_4] : memref<8x1xf32, #tpu.memory_space<vmem>>, vector<8x1xf32>
    %4 = vector.broadcast %3 : vector<8x1xf32> to vector<8x256xf32>
    %5 = arith.mulf %2, %4 : vector<8x256xf32>
    %c0_5 = arith.constant 0 : index
    %c0_6 = arith.constant 0 : index
    %6 = vector.load %arg5[%c0_5, %c0_6] : memref<1x256xf32, #tpu.memory_space<vmem>>, vector<1x256xf32>
    %7 = vector.broadcast %6 : vector<1x256xf32> to vector<8x256xf32>
    %8 = arith.mulf %5, %7 : vector<8x256xf32>
    %cst_7 = arith.constant -1.000000e+00 : f32
    %cst_8 = arith.constant 1.000000e+00 : f32
    %9 = vector.broadcast %cst_7 : f32 to vector<8x256xf32>
    %10 = arith.maximumf %9, %8 : vector<8x256xf32>
    %11 = vector.broadcast %cst_8 : f32 to vector<8x256xf32>
    %12 = arith.minimumf %11, %10 : vector<8x256xf32>
    %13 = tpu.iota {dimensions = array<i32: 1>} : vector<8x256xi32>
    %c256_i32 = arith.constant 256 : i32
    %14 = arith.muli %arg1, %c256_i32 : i32
    %15 = vector.broadcast %14 : i32 to vector<8x256xi32>
    %16 = arith.addi %13, %15 : vector<8x256xi32>
    %c0_9 = arith.constant 0 : index
    %c0_10 = arith.constant 0 : index
    %17 = vector.load %arg6[%c0_9, %c0_10] : memref<8x1xi32, #tpu.memory_space<vmem>>, vector<8x1xi32>
    %18 = vector.broadcast %17 : vector<8x1xi32> to vector<8x256xi32>
    %19 = arith.cmpi eq, %16, %18 : vector<8x256xi32>
    %c-1_i32 = arith.constant -1 : i32
    %20 = vector.broadcast %c-1_i32 : i32 to vector<8x1xi32>
    %21 = arith.cmpi ne, %17, %20 : vector<8x1xi32>
    %22 = vector.broadcast %21 : vector<8x1xi1> to vector<8x256xi1>
    %23 = arith.andi %19, %22 : vector<8x256xi1>
    %cst_11 = arith.constant 3.500000e-01 : f32
    %cst_12 = arith.constant 0.000000e+00 : f32
    %24 = vector.broadcast %cst_11 : f32 to vector<8x256xf32>
    %25 = vector.broadcast %cst_12 : f32 to vector<8x256xf32>
    %26 = arith.select %23, %24, %25 : vector<8x256xi1>, vector<8x256xf32>
    %27 = arith.subf %12, %26 : vector<8x256xf32>
    %cst_13 = arith.constant 6.400000e+01 : f32
    %28 = vector.broadcast %cst_13 : f32 to vector<8x256xf32>
    %29 = arith.mulf %27, %28 : vector<8x256xf32>
    %c0_14 = arith.constant 0 : index
    %c0_15 = arith.constant 0 : index
    %30 = vector.load %arg7[%c0_14, %c0_15] : memref<8x256xf32, #tpu.memory_space<vmem>>, vector<8x256xf32>
    tpu.vector_store %arg7[%c0_14, %c0_15], %29 {strides = array<i32>} : memref<8x256xf32, #tpu.memory_space<vmem>>, vector<8x256xf32>,
    return
  }
  func.func @transform_0(%arg0: i32, %arg1: i32) -> (i32, i32) {
    %c0_i32 = arith.constant 0 : i32
    %c0_i32_0 = arith.constant 0 : i32
    return %arg0, %c0_i32 : i32, i32
  }
  func.func @transform_1(%arg0: i32, %arg1: i32) -> (i32, i32) {
    %c0_i32 = arith.constant 0 : i32
    %c0_i32_0 = arith.constant 0 : i32
    return %c0_i32, %arg1 : i32, i32
  }
  func.func @transform_2(%arg0: i32, %arg1: i32) -> (i32, i32) {
    %c0_i32 = arith.constant 0 : i32
    %c0_i32_0 = arith.constant 0 : i32
    return %arg0, %c0_i32 : i32, i32
  }
  func.func @transform_3(%arg0: i32, %arg1: i32) -> (i32, i32) {
    %c0_i32 = arith.constant 0 : i32
    %c0_i32_0 = arith.constant 0 : i32
    return %c0_i32, %arg1 : i32, i32
  }
  func.func @transform_4(%arg0: i32, %arg1: i32) -> (i32, i32) {
    %c0_i32 = arith.constant 0 : i32
    %c0_i32_0 = arith.constant 0 : i32
    return %arg0, %c0_i32 : i32, i32
  }
  func.func @transform_5(%arg0: i32, %arg1: i32) -> (i32, i32) {
    %c0_i32 = arith.constant 0 : i32
    return %arg0, %arg1 : i32, i32
  }
}

</mosaic_0001>

<llo_original>
// kernel: tpu_custom_call.1
$region0: #{tpu_custom_call.1}
  #allocation0 [shape = 'u32[]', space=smem, size = 0x4, offset = 0x4, fixed_abs, tag = 'smem constant byte address 0x4 - core index']
  #allocation1 [shape = 'u32[72,128]{1,0:T(1,128)}', space=vmem, size = 0x9000, scoped, tag = 'internal scratch']
  %s0 = inlined_call_operand.vmem [shape: f32[8,32], index: 0, kind: input, shape index: {}]
  %s1 = inlined_call_operand.hbm [shape: f32[32,256], index: 1, kind: input, shape index: {}]
  %s2 = inlined_call_operand.vmem [shape: f32[8,1], index: 2, kind: input, shape index: {}]
  %s3 = inlined_call_operand.vmem [shape: f32[1,256], index: 3, kind: input, shape index: {}]
  %s4 = inlined_call_operand.vmem [shape: s32[8,1], index: 4, kind: input, shape index: {}]
  %s5 = inlined_call_operand.hbm [shape: f32[8,256], index: 5, kind: output, shape index: {}]
  %s6 = sld [smem:[#allocation0]]
  $region34: #{tpu_custom_call.1} parent=0
    _
  %s8 = ssub.s32 1, %s6
  %s9 = scalar_select 0, %s8, %s6
  $region1: #{tpu_custom_call.1} parent=0
    #allocation2 [shape = 'u8[32768]{0}', space=vmem, size = 0x8000, scoped, tag = 'input window, operand 1, single buffered']
    #allocation3 [shape = 's32[1]{0}', space=sflag, size = 0x4, scoped, tag = 'scoped memory for tpu_custom_call.1']
    #allocation4 [shape = 's32[1]{0}', space=sflag, size = 0x4, scoped, tag = 'scoped memory for tpu_custom_call.1']
    #allocation5 [shape = 'u8[8192]{0}', space=vmem, size = 0x2000, scoped, tag = 'output window, operand 0, single buffered']
    %10 = vsyncpa [#allocation3], 0
    %11 = vsyncpa [#allocation4], 0
    // Predicated region
    $region2: #{tpu_custom_call.1} parent=1 // pred_check
      _
    $region3: #{tpu_custom_call.1} parent=1 // pred_check_branch
      %13 = sbr.rel (0) target = $region5
    $region4: #{tpu_custom_call.1} parent=1 // pred_region
      _
    $region5: #{tpu_custom_call.1} parent=1 // pred_fallthru
      _
    // Predicated region
    $region6: #{tpu_custom_call.1} parent=1 // pred_check
      _
    $region7: #{tpu_custom_call.1} parent=1 // pred_check_branch
      %15 = sbr.rel (0) target = $region9
    $region8: #{tpu_custom_call.1} parent=1 // pred_region
      %17 = vsyncadd [#allocation3], 0
      %s18 = sshll.u32 %s1, 4
      %s19 = int_to_ptr.hbm [resolvable:$true] %s18
      %s20 = sshll.u32 [#allocation2], 4
      %s21 = int_to_ptr.vmem [resolvable:$true] %s20
      %26 = dma.hbm_to_vmem [thread:$0]  %s19, 1024, %s21, [#allocation3], 256, 256, 16
    $region9: #{tpu_custom_call.1} parent=1 // pred_fallthru
      _
    // Predicated region
    $region10: #{tpu_custom_call.1} parent=1 // pred_check
      _
    $region11: #{tpu_custom_call.1} parent=1 // pred_check_branch
      %28 = sbr.rel (0) target = $region13
    $region12: #{tpu_custom_call.1} parent=1 // pred_region
      _
    $region13: #{tpu_custom_call.1} parent=1 // pred_fallthru
      _
    // Predicated region
    $region14: #{tpu_custom_call.1} parent=1 // pred_check
      _
    $region15: #{tpu_custom_call.1} parent=1 // pred_check_branch
      %30 = sbr.rel (0) target = $region17
    $region16: #{tpu_custom_call.1} parent=1 // pred_region
      _
    $region17: #{tpu_custom_call.1} parent=1 // pred_fallthru
      _
    // Predicated region
    $region18: #{tpu_custom_call.1} parent=1 // pred_check
      _
    $region19: #{tpu_custom_call.1} parent=1 // pred_check_branch
      %32 = sbr.rel (0) target = $region21
    $region20: #{tpu_custom_call.1} parent=1 // pred_region
      _
    $region21: #{tpu_custom_call.1} parent=1 // pred_fallthru
      _
    // Predicated region
    $region22: #{tpu_custom_call.1} parent=1 // pred_check
      _
    $region23: #{tpu_custom_call.1} parent=1 // pred_check_branch
      %34 = sbr.rel (0) target = $region25
    $region24: #{tpu_custom_call.1} parent=1 // pred_region
      %36 = dma.done [#allocation3], 1024
    $region25: #{tpu_custom_call.1} parent=1 // pred_fallthru
      _
    %v37 = vld [vmem:[%s0] sm:$0xff]
    %v38 = vld [vmem:[#allocation2] sm:$0xff]
    %v39 = vld [vmem:[#allocation2 + $0x8] sm:$0xff]
    %v40 = vld [vmem:[#allocation2 + $0x10] sm:$0xff]
    %v41 = vld [vmem:[#allocation2 + $0x18] sm:$0xff]
    %v42 = vld [vmem:[#allocation2 + $0x20] sm:$0xff]
    %v43 = vld [vmem:[#allocation2 + $0x28] sm:$0xff]
    %v44 = vld [vmem:[#allocation2 + $0x30] sm:$0xff]
    %v45 = vld [vmem:[#allocation2 + $0x38] sm:$0xff]
    %vm46 = vcmask 261120
    %v48 = vsel %vm46, %v37, 0
    %50 = vmatpush.msra.mxu0 0.0
    %51 = vmatpush.msra.mxu0 0.0
    %52 = vmatpush.msra.mxu0 0.0
    %53 = vmatpush.msra.mxu0 0.0
    %54 = vmatpush.msra.mxu0 0.0
    %55 = vmatpush.msra.mxu0 0.0
    %56 = vmatpush.msra.mxu0 0.0
    %57 = vmatpush.msra.mxu0 0.0
    %58 = vmatpush.msra.mxu0 0.0
    %59 = vmatpush.msra.mxu0 0.0
    %60 = vmatpush.msra.mxu0 0.0
    %61 = vmatpush.msra.mxu0 0.0
    %62 = vmatpush.msra.mxu0 %v44
    %63 = vmatpush.msra.mxu0 %v42
    %64 = vmatpush.msra.mxu0 %v40
    %65 = vmatpush.msra.mxu0 %v38
    %66 = vmatmul.f32.gmra.mxu0 %v48
    %v67 = vpop.f32.mrf.mxu0
    %v68 = vadd.f32 0.0, %v67
    %69 = vdwg.mxu0
    %70 = vmatpush.msra.mxu0 0.0
    %71 = vmatpush.msra.mxu0 0.0
    %72 = vmatpush.msra.mxu0 0.0
    %73 = vmatpush.msra.mxu0 0.0
    %74 = vmatpush.msra.mxu0 0.0
    %75 = vmatpush.msra.mxu0 0.0
    %76 = vmatpush.msra.mxu0 0.0
    %77 = vmatpush.msra.mxu0 0.0
    %78 = vmatpush.msra.mxu0 0.0
    %79 = vmatpush.msra.mxu0 0.0
    %80 = vmatpush.msra.mxu0 0.0
    %81 = vmatpush.msra.mxu0 0.0
    %82 = vmatpush.msra.mxu0 %v45
    %83 = vmatpush.msra.mxu0 %v43
    %84 = vmatpush.msra.mxu0 %v41
    %85 = vmatpush.msra.mxu0 %v39
    %86 = vmatmul.f32.gmra.mxu0 %v48
    %v87 = vpop.f32.mrf.mxu0
    %v88 = vadd.f32 0.0, %v87
    %89 = vdwg.mxu0
    %v90 = vld [vmem:[%s2] sm:$0xff]
    %92 = vset.pattern.permute.xlu0 0
    %93 = vperm.xlu0 %92, %v90
    %v94 = vpop.permute.xlu0 %93
    %v96 = vmul.f32 %v68, %v94
    %v97 = vmul.f32 %v88, %v94
    %v98 = vld [vmem:[%s3] sm:$0x3]
    %v100 = vperm.slane %v98, 0
    %v101 = vperm.slane %v98, 1
    %v104 = vmul.f32 %v96, %v100
    %v105 = vmul.f32 %v97, %v101
    %v106 = vmax.f32 %v104, -1.0
    %v107 = vmax.f32 %v105, -1.0
    %v108 = vmin.f32 %v106, 1.0
    %v109 = vmin.f32 %v107, 1.0
    %v110 = vlaneseq
    %v111 = vand.u32 %v110, 127
    %v112 = vadd.s32 %v111, 128
    %s113 = smul.u32 0, 256
    %v114 = vstv %s113
    %v115 = vadd.s32 %v111, %v114
    %v116 = vadd.s32 %v112, %v114
    %v117 = vld [vmem:[%s4] sm:$0xff]
    %118 = vset.pattern.permute.xlu0 0
    %119 = vperm.xlu0 %118, %v117
    %v120 = vpop.permute.xlu0 %119
    %vm121 = vcmp.eq.s32.totalorder %v115, %v120
    %vm122 = vcmp.eq.s32.totalorder %v116, %v120
    %vm123 = vcmp.ne.s32.totalorder %v117, 4294967295
    %v124 = vsel %vm123, 1, 0
    %125 = vset.pattern.permute.xlu0 0
    %126 = vperm.xlu0 %125, %v124
    %v127 = vpop.permute.xlu0 %126
    %vm128 = vcmp.eq.s32.totalorder %v127, 1
    %vm129 = vmand %vm121, %vm128
    %vm130 = vmand %vm122, %vm128
    %v131 = vsel %vm129, 0.35, 0.0
    %v132 = vsel %vm130, 0.35, 0.0
    %v133 = vsub.f32 %v108, %v131
    %v134 = vsub.f32 %v109, %v132
    %v135 = vmul.f32 %v133, 64.0
    %v136 = vmul.f32 %v134, 64.0
    %137 = vst [vmem:[#allocation5] sm:$0xff] %v135
    %138 = vst [vmem:[#allocation5 + $0x8] sm:$0xff] %v136
    // Predicated region
    $region26: #{tpu_custom_call.1} parent=1 // pred_check
      _
    $region27: #{tpu_custom_call.1} parent=1 // pred_check_branch
      %140 = sbr.rel (0) target = $region29
    $region28: #{tpu_custom_call.1} parent=1 // pred_region
      %142 = vsyncadd [#allocation4], 0
      %s144 = sshll.u32 [#allocation5], 4
      %s145 = int_to_ptr.vmem [resolvable:$true] %s144
      %s146 = sshll.u32 %s5, 4
      %s147 = int_to_ptr.hbm [resolvable:$true] %s146
      %149 = dma.vmem_to_hbm [thread:$0]  %s145, 256, %s147, [#allocation4]
    $region29: #{tpu_custom_call.1} parent=1 // pred_fallthru
      _
    // Predicated region
    $region30: #{tpu_custom_call.1} parent=1 // pred_check
      _
    $region31: #{tpu_custom_call.1} parent=1 // pred_check_branch
      %151 = sbr.rel (0) target = $region33
    $region32: #{tpu_custom_call.1} parent=1 // pred_region
      %153 = dma.done [#allocation4], 256
    $region33: #{tpu_custom_call.1} parent=1 // pred_fallthru
      _
    %154 = vsyncpa [#allocation3], 1
    %155 = vsyncpa [#allocation4], 1

</llo_original>
